<compile_context>
chip_gen: v7x
topology: tpu7x:2x2x1
jax: 0.10.0
libtpu: 0.0.40
codegen_flags: <defaults>
</compile_context>

<pallas_src>
import functools

import jax
import jax.numpy as jnp
from jax.experimental import pallas as pl
from jax.experimental.pallas import tpu as pltpu

LANES = 128
BLOCK_BYTES = 4 * 1024 * 1024        # per input, per pipeline buffer (~4 MiB)
CHUNK_ROWS = 1024                    # in-kernel compute chunk (bounds temps)
VMEM_LIMIT_BYTES = 32 * 1024 * 1024  # explicit: > v5e 16 MiB default, < v7x 64 MiB


def _round_up(v: int, m: int) -> int:
    return (v + m - 1) // m * m


def _sublane_multiple(dtype) -> int:
    # Second-minor tile multiple for the dtype's sublane packing:
    # f32 -> 8, bf16/f16 -> 16, int8/fp8 -> 32.
    return max(8, 32 // jnp.dtype(dtype).itemsize)


def _l2_loss_kernel(x_ref, t_ref, num_ref, den_ref, *,
                    rows, block_rows, chunk, needs_mask):
    # Grid = (split, reduction step). num_ref/den_ref are per-split (8,128)
    # partial-sum accumulators, VMEM-resident across the "arbitrary" axis.
    s = pl.program_id(0)
    k = pl.program_id(1)

    @pl.when(k == 0)
    def _():
        num_ref[...] = jnp.zeros_like(num_ref)
        den_ref[...] = jnp.zeros_like(den_ref)

    # Global (unclamped) block index; duplicate trailing steps of the odd-count
    # 2-way split land here with g >= num_blocks and get fully masked out.
    g = s * pl.num_programs(1) + k
    nchunks = block_rows // chunk

    def accumulate(x, t, base_row, carry):
        num_acc, den_acc = carry
        x = x.astype(jnp.float32)
        t = t.astype(jnp.float32)
        if needs_mask:
            # Mask rows past the true row count (ragged tail block / duplicate
            # split step).  Masking BEFORE any arithmetic discards whatever
            # unspecified values the padded block region holds.
            row_ids = jax.lax.broadcasted_iota(jnp.int32, x.shape, 0)
            valid = (base_row + row_ids) < rows
            x = jnp.where(valid, x, 0.0)
            t = jnp.where(valid, t, 0.0)
        d = x - t
        # Sublane-aligned fold (chunk,128) -> (8,128): pure VPU, no XLU.
        num_acc = num_acc + jnp.sum((d * d).reshape(-1, 8, LANES), axis=0)
        den_acc = den_acc + jnp.sum((t * t).reshape(-1, 8, LANES), axis=0)
        return num_acc, den_acc

    zero = jnp.zeros((8, LANES), jnp.float32)
    if nchunks == 1:
        num_p, den_p = accumulate(x_ref[...], t_ref[...],
                                  g * block_rows, (zero, zero))
    else:
        def body(c, carry):
            r0 = pl.multiple_of(c * chunk, chunk)
            return accumulate(x_ref[pl.ds(r0, chunk), :],
                              t_ref[pl.ds(r0, chunk), :],
                              g * block_rows + c * chunk, carry)
        num_p, den_p = jax.lax.fori_loop(0, nchunks, body, (zero, zero))

    num_ref[0] += num_p
    den_ref[0] += den_p


def l2_loss(input_arr: jax.Array, target_arr: jax.Array) -> jax.Array:
    assert input_arr.shape == target_arr.shape
    n = input_arr.size
    assert n > 0

    x_flat = input_arr.reshape(-1)
    t_flat = target_arr.reshape(-1)

    # Minimal lane pad (<=127 zeros, exact for both sums) only when
    # numel % 128 != 0.  The old block-multiple pad is gone: ragged tails are
    # masked in-kernel instead of being materialized in HBM.
    # TODO(synk): a manual-DMA 1-D path could drop even this copy when
    # numel % 128 != 0.
    rem = n % LANES
    if rem:
        x_flat = jnp.pad(x_flat, (0, LANES - rem))
        t_flat = jnp.pad(t_flat, (0, LANES - rem))
    rows = x_flat.size // LANES
    x2d = x_flat.reshape(rows, LANES)
    t2d = t_flat.reshape(rows, LANES)

    x_item = jnp.dtype(x2d.dtype).itemsize
    t_item = jnp.dtype(t2d.dtype).itemsize

    # ~4 MiB per input per pipeline buffer (8192 rows f32 / 16384 rows bf16),
    # shrunk (sublane-aligned) for small inputs so a block never exceeds data.
    sub = max(_sublane_multiple(x2d.dtype), _sublane_multiple(t2d.dtype))
    max_rows = BLOCK_BYTES // (LANES * max(x_item, t_item))
    block_rows = min(max_rows, _round_up(rows, sub))
    if block_rows > CHUNK_ROWS:
        # Keep block_rows a multiple of the compute chunk so chunked in-kernel
        # reads never step outside the VMEM block.
        block_rows = _round_up(block_rows, CHUNK_ROWS)
    chunk = min(CHUNK_ROWS, block_rows)

    # Logical (cdiv) grid: no physical padding to a block multiple.
    num_blocks = pl.cdiv(rows, block_rows)
    # 2-way split along a "parallel" leading axis so v7x's two TensorCores can
    # each stream ~half the data (harmless on single-TC v5e/v6e).
    # TODO(synk): verify plain "parallel" shards across v7x TensorCores; if
    # not, switch this axis to pltpu.CORE_PARALLEL.
    nsplit = 2 if num_blocks >= 2 else 1
    blocks_per_split = pl.cdiv(num_blocks, nsplit)
    needs_mask = (num_blocks * block_rows != rows) or (
        nsplit * blocks_per_split != num_blocks)

    if nsplit * blocks_per_split == num_blocks:
        def in_index(s, k):
            return (s * blocks_per_split + k, 0)
    else:
        def in_index(s, k):
            # Clamp the duplicate trailing step (odd block count) onto the
            # last real block; its contribution is masked to zero in-kernel.
            return (jnp.minimum(s * blocks_per_split + k, num_blocks - 1), 0)

    in_spec = pl.BlockSpec((block_rows, LANES), in_index)
    # Lane-dense (8,128) per-split partials; the tiny final cross-lane reduce
    # happens in the wrapper.  (Default double-buffering: DMA is not exposed
    # at these tile sizes; pl.Buffered(3) only if a bundle dump shows it.)
    out_spec = pl.BlockSpec((1, 8, LANES), lambda s, k: (s, 0, 0))

    kernel = functools.partial(
        _l2_loss_kernel, rows=rows, block_rows=block_rows, chunk=chunk,
        needs_mask=needs_mask)

    cost = pl.CostEstimate(
        flops=5 * n, transcendentals=0,
        bytes_accessed=n * (x_item + t_item) + nsplit * 2 * 8 * LANES * 4)

    num_out, den_out = pl.pallas_call(
        kernel,
        out_shape=(
            jax.ShapeDtypeStruct((nsplit, 8, LANES), jnp.float32),
            jax.ShapeDtypeStruct((nsplit, 8, LANES), jnp.float32),
        ),
        grid_spec=pltpu.PrefetchScalarGridSpec(
            num_scalar_prefetch=0,
            grid=(nsplit, blocks_per_split),
            in_specs=[in_spec, in_spec],
            out_specs=[out_spec, out_spec],
        ),
        compiler_params=pltpu.CompilerParams(
            dimension_semantics=("parallel", "arbitrary"),
            vmem_limit_bytes=VMEM_LIMIT_BYTES),
        cost_estimate=cost,
    )(x2d, t2d)

    # Single tiny cross-lane reduce + scalar divide.
    return jnp.sum(num_out) / jnp.sum(den_out)


if __name__ == "__main__":
    key = jax.random.PRNGKey(0)
    k1, k2, k3, k4, k5, k6 = jax.random.split(key, 6)

    # Test 1: small NCHW f32 (exact lane multiple, single block, no masking).
    x = jax.random.normal(k1, (2, 4, 16, 16), dtype=jnp.float32)
    t = jax.random.normal(k2, (2, 4, 16, 16), dtype=jnp.float32)
    loss = l2_loss(x, t)
    jax.block_until_ready(loss)
    ref = jnp.sum((x - t) ** 2) / jnp.sum(t ** 2)
    assert jnp.allclose(loss, ref, rtol=1e-5, atol=1e-6), (loss, ref)

    # Test 2: bf16 input exercising the 2-way split with an odd block count
    # (duplicate-step clamp) and the masked ragged tail block.
    xb = jax.random.normal(k3, (25, 160, 32, 40), dtype=jnp.bfloat16)
    tb = jax.random.normal(k4, (25, 160, 32, 40), dtype=jnp.bfloat16)
    loss_b = l2_loss(xb, tb)
    jax.block_until_ready(loss_b)
    xf, tf = xb.astype(jnp.float32), tb.astype(jnp.float32)
    ref_b = jnp.sum((xf - tf) ** 2) / jnp.sum(tf ** 2)
    assert jnp.allclose(loss_b, ref_b, rtol=1e-3, atol=1e-6), (loss_b, ref_b)

    # Test 3: ragged element count (numel % 128 != 0) exercising the minimal
    # lane pad + in-kernel row mask.
    xr = jax.random.normal(k5, (3, 5, 17, 19), dtype=jnp.float32)
    tr = jax.random.normal(k6, (3, 5, 17, 19), dtype=jnp.float32)
    loss_r = l2_loss(xr, tr)
    jax.block_until_ready(loss_r)
    ref_r = jnp.sum((xr - tr) ** 2) / jnp.sum(tr ** 2)
    assert jnp.allclose(loss_r, ref_r, rtol=1e-4, atol=1e-6), (loss_r, ref_r)

    print("KERNEL_OK")
</pallas_src>

<mosaic_0001>
module attributes {stable_mosaic.version = 11 : i64} {
  func.func @_l2_loss_kernel(%arg0: i32, %arg1: i32, %arg2: memref<16x128xf32, #tpu.memory_space<vmem>>, %arg3: memref<16x128xf32, #tpu.memory_space<vmem>>, %arg4: memref<1x8x128xf32, #tpu.memory_space<vmem>>, %arg5: memref<1x8x128xf32, #tpu.memory_space<vmem>>) attributes {dimension_semantics = [#tpu.dimension_semantics<parallel>, #tpu.dimension_semantics<arbitrary>], iteration_bounds = array<i64: 1, 1>, scalar_prefetch = 0 : i64, scratch_operands = 0 : i64, tpu.core_type = #tpu.core_type<tc>, window_params = [{transform_indices = @transform_0, window_bounds = array<i64: 16, 128>}, {transform_indices = @transform_1, window_bounds = array<i64: 16, 128>}, {transform_indices = @transform_2, window_bounds = array<i64: 1, 8, 128>}, {transform_indices = @transform_3, window_bounds = array<i64: 1, 8, 128>}]} {
    %c0_i32 = arith.constant 0 : i32
    %0 = arith.cmpi eq, %arg1, %c0_i32 : i32
    %1 = arith.extui %0 : i1 to i32
    %c0_i32_0 = arith.constant 0 : i32
    %2 = arith.cmpi ne, %1, %c0_i32_0 : i32
    scf.if %2 {
      %cst_18 = arith.constant 0.000000e+00 : f32
      %27 = vector.broadcast %cst_18 : f32 to vector<1x8x128xf32>
      %c0_19 = arith.constant 0 : index
      %c0_20 = arith.constant 0 : index
      %c0_21 = arith.constant 0 : index
      %28 = vector.load %arg4[%c0_19, %c0_20, %c0_21] : memref<1x8x128xf32, #tpu.memory_space<vmem>>, vector<1x8x128xf32>
      tpu.vector_store %arg4[%c0_19, %c0_20, %c0_21], %27 {strides = array<i32>} : memref<1x8x128xf32, #tpu.memory_space<vmem>>, vector<1x8x128xf32>,
      %cst_22 = arith.constant 0.000000e+00 : f32
      %29 = vector.broadcast %cst_22 : f32 to vector<1x8x128xf32>
      %c0_23 = arith.constant 0 : index
      %c0_24 = arith.constant 0 : index
      %c0_25 = arith.constant 0 : index
      %30 = vector.load %arg5[%c0_23, %c0_24, %c0_25] : memref<1x8x128xf32, #tpu.memory_space<vmem>>, vector<1x8x128xf32>
      tpu.vector_store %arg5[%c0_23, %c0_24, %c0_25], %29 {strides = array<i32>} : memref<1x8x128xf32, #tpu.memory_space<vmem>>, vector<1x8x128xf32>,
    } else {
    }
    %cst = arith.constant 0.000000e+00 : f32
    %3 = vector.broadcast %cst : f32 to vector<8x128xf32>
    %c0 = arith.constant 0 : index
    %c0_1 = arith.constant 0 : index
    %4 = vector.load %arg2[%c0, %c0_1] : memref<16x128xf32, #tpu.memory_space<vmem>>, vector<16x128xf32>
    %c0_2 = arith.constant 0 : index
    %c0_3 = arith.constant 0 : index
    %5 = vector.load %arg3[%c0_2, %c0_3] : memref<16x128xf32, #tpu.memory_space<vmem>>, vector<16x128xf32>
    %6 = arith.subf %4, %5 : vector<16x128xf32>
    %7 = arith.mulf %6, %6 : vector<16x128xf32>
    %8 = vector.shape_cast %7 : vector<16x128xf32> to vector<2x8x128xf32>
    %cst_4 = arith.constant dense<0.000000e+00> : vector<8x128xf32>
    %9 = vector.multi_reduction <add>, %8, %cst_4 [0] : vector<2x8x128xf32> to vector<8x128xf32>
    %10 = arith.addf %3, %9 : vector<8x128xf32>
    %11 = arith.mulf %5, %5 : vector<16x128xf32>
    %12 = vector.shape_cast %11 : vector<16x128xf32> to vector<2x8x128xf32>
    %cst_5 = arith.constant dense<0.000000e+00> : vector<8x128xf32>
    %13 = vector.multi_reduction <add>, %12, %cst_5 [0] : vector<2x8x128xf32> to vector<8x128xf32>
    %14 = arith.addf %3, %13 : vector<8x128xf32>
    %c0_6 = arith.constant 0 : index
    %c0_7 = arith.constant 0 : index
    %c0_8 = arith.constant 0 : index
    %15 = vector.load %arg4[%c0_6, %c0_7, %c0_8] : memref<1x8x128xf32, #tpu.memory_space<vmem>>, vector<1x8x128xf32>
    %16 = vector.shape_cast %15 : vector<1x8x128xf32> to vector<8x128xf32>
    %17 = arith.addf %16, %10 : vector<8x128xf32>
    %c0_9 = arith.constant 0 : index
    %c0_10 = arith.constant 0 : index
    %c0_11 = arith.constant 0 : index
    %18 = vector.load %arg4[%c0_9, %c0_10, %c0_11] : memref<1x8x128xf32, #tpu.memory_space<vmem>>, vector<1x8x128xf32>
    %19 = vector.shape_cast %18 : vector<1x8x128xf32> to vector<8x128xf32>
    %20 = vector.shape_cast %17 : vector<8x128xf32> to vector<1x8x128xf32>
    tpu.vector_store %arg4[%c0_9, %c0_10, %c0_11], %20 {strides = array<i32>} : memref<1x8x128xf32, #tpu.memory_space<vmem>>, vector<1x8x128xf32>,
    %c0_12 = arith.constant 0 : index
    %c0_13 = arith.constant 0 : index
    %c0_14 = arith.constant 0 : index
    %21 = vector.load %arg5[%c0_12, %c0_13, %c0_14] : memref<1x8x128xf32, #tpu.memory_space<vmem>>, vector<1x8x128xf32>
    %22 = vector.shape_cast %21 : vector<1x8x128xf32> to vector<8x128xf32>
    %23 = arith.addf %22, %14 : vector<8x128xf32>
    %c0_15 = arith.constant 0 : index
    %c0_16 = arith.constant 0 : index
    %c0_17 = arith.constant 0 : index
    %24 = vector.load %arg5[%c0_15, %c0_16, %c0_17] : memref<1x8x128xf32, #tpu.memory_space<vmem>>, vector<1x8x128xf32>
    %25 = vector.shape_cast %24 : vector<1x8x128xf32> to vector<8x128xf32>
    %26 = vector.shape_cast %23 : vector<8x128xf32> to vector<1x8x128xf32>
    tpu.vector_store %arg5[%c0_15, %c0_16, %c0_17], %26 {strides = array<i32>} : memref<1x8x128xf32, #tpu.memory_space<vmem>>, vector<1x8x128xf32>,
    return
  }
  func.func @transform_0(%arg0: i32, %arg1: i32) -> (i32, i32) {
    %c1_i32 = arith.constant 1 : i32
    %0 = arith.muli %arg0, %c1_i32 : i32
    %1 = arith.addi %0, %arg1 : i32
    %c0_i32 = arith.constant 0 : i32
    %c0_i32_0 = arith.constant 0 : i32
    return %1, %c0_i32 : i32, i32
  }
  func.func @transform_1(%arg0: i32, %arg1: i32) -> (i32, i32) {
    %c1_i32 = arith.constant 1 : i32
    %0 = arith.muli %arg0, %c1_i32 : i32
    %1 = arith.addi %0, %arg1 : i32
    %c0_i32 = arith.constant 0 : i32
    %c0_i32_0 = arith.constant 0 : i32
    return %1, %c0_i32 : i32, i32
  }
  func.func @transform_2(%arg0: i32, %arg1: i32) -> (i32, i32, i32) {
    %c0_i32 = arith.constant 0 : i32
    %c0_i32_0 = arith.constant 0 : i32
    %c0_i32_1 = arith.constant 0 : i32
    return %arg0, %c0_i32, %c0_i32_0 : i32, i32, i32
  }
  func.func @transform_3(%arg0: i32, %arg1: i32) -> (i32, i32, i32) {
    %c0_i32 = arith.constant 0 : i32
    %c0_i32_0 = arith.constant 0 : i32
    %c0_i32_1 = arith.constant 0 : i32
    return %arg0, %c0_i32, %c0_i32_0 : i32, i32, i32
  }
}

</mosaic_0001>

<llo_original>
// kernel: tpu_custom_call.1
$region0: #{tpu_custom_call.1}
  #allocation0 [shape = 'u32[]', space=smem, size = 0x4, offset = 0x4, fixed_abs, tag = 'smem constant byte address 0x4 - core index']
  #allocation1 [shape = 'u32[144,128]{1,0:T(1,128)}', space=vmem, size = 0x12000, scoped, tag = 'internal scratch']
  %s0 = inlined_call_operand.hbm [shape: f32[16,128], index: 0, kind: input, shape index: {}]
  %s1 = inlined_call_operand.hbm [shape: f32[16,128], index: 1, kind: input, shape index: {}]
  %s2 = inlined_call_operand.hbm [shape: f32[1,8,128], index: 2, kind: output, shape index: {0}]
  %s3 = inlined_call_operand.hbm [shape: f32[1,8,128], index: 3, kind: output, shape index: {1}]
  %4 = xla_tuple %s2, %s3
  %s5 = sld [smem:[#allocation0]]
  $region38: #{tpu_custom_call.1} parent=0
    _
  %s7 = ssub.s32 1, %s5
  %s8 = scalar_select 0, %s7, %s5
  $region1: #{tpu_custom_call.1} parent=0
    #allocation2 [shape = 'u8[8192]{0}', space=vmem, size = 0x2000, scoped, tag = 'input window, operand 0, single buffered']
    #allocation3 [shape = 's32[1]{0}', space=sflag, size = 0x4, scoped, tag = 'scoped memory for tpu_custom_call.1']
    #allocation4 [shape = 's32[1]{0}', space=sflag, size = 0x4, scoped, tag = 'scoped memory for tpu_custom_call.1']
    #allocation5 [shape = 'u8[8192]{0}', space=vmem, size = 0x2000, scoped, tag = 'input window, operand 1, single buffered']
    #allocation6 [shape = 's32[1]{0}', space=sflag, size = 0x4, scoped, tag = 'scoped memory for tpu_custom_call.1']
    #allocation7 [shape = 'u8[4096]{0}', space=vmem, size = 0x1000, scoped, tag = 'output window, operand 0, single buffered']
    #allocation8 [shape = 'u8[4096]{0}', space=vmem, size = 0x1000, scoped, tag = 'output window, operand 1, single buffered']
    #allocation9 [shape = 's32[1]{0}', space=sflag, size = 0x4, scoped, tag = 'scoped memory for tpu_custom_call.1']
    %9 = vsyncpa [#allocation3], 0
    %10 = vsyncpa [#allocation6], 0
    %11 = vsyncpa [#allocation4], 0
    %12 = vsyncpa [#allocation9], 0
    // Predicated region
    $region2: #{tpu_custom_call.1} parent=1 // pred_check
      _
    $region3: #{tpu_custom_call.1} parent=1 // pred_check_branch
      %14 = sbr.rel (0) target = $region5
    $region4: #{tpu_custom_call.1} parent=1 // pred_region
      %s15 = sadd.s32 0, 0
      %s16 = smul.u32 2, %s15
      %s18 = ssub.s32 256, 256
      %19 = vsyncadd [#allocation3], %s18
      %s20 = smul.addr %s16, 128
      %s21 = scalar_lea.hbm %s0, %s20
      %s22 = sshll.u32 [#allocation2], 4
      %s23 = int_to_ptr.vmem [resolvable:$true] %s22
      %28 = dma.hbm_to_vmem [thread:$0]  %s21, 256, %s23, [#allocation3], 128, 128, 8
    $region5: #{tpu_custom_call.1} parent=1 // pred_fallthru
      _
    // Predicated region
    $region6: #{tpu_custom_call.1} parent=1 // pred_check
      _
    $region7: #{tpu_custom_call.1} parent=1 // pred_check_branch
      %30 = sbr.rel (0) target = $region9
    $region8: #{tpu_custom_call.1} parent=1 // pred_region
      %s31 = sadd.s32 0, 0
      %s32 = smul.u32 2, %s31
      %s34 = ssub.s32 256, 256
      %35 = vsyncadd [#allocation6], %s34
      %s36 = smul.addr %s32, 128
      %s37 = scalar_lea.hbm %s1, %s36
      %s38 = sshll.u32 [#allocation5], 4
      %s39 = int_to_ptr.vmem [resolvable:$true] %s38
      %44 = dma.hbm_to_vmem [thread:$0]  %s37, 256, %s39, [#allocation6], 128, 128, 8
    $region9: #{tpu_custom_call.1} parent=1 // pred_fallthru
      _
    // Predicated region
    $region10: #{tpu_custom_call.1} parent=1 // pred_check
      _
    $region11: #{tpu_custom_call.1} parent=1 // pred_check_branch
      %46 = sbr.rel (0) target = $region13
    $region12: #{tpu_custom_call.1} parent=1 // pred_region
      %47 = dma.done [#allocation3], 256
    $region13: #{tpu_custom_call.1} parent=1 // pred_fallthru
      _
    // Predicated region
    $region14: #{tpu_custom_call.1} parent=1 // pred_check
      _
    $region15: #{tpu_custom_call.1} parent=1 // pred_check_branch
      %49 = sbr.rel (0) target = $region17
    $region16: #{tpu_custom_call.1} parent=1 // pred_region
      %50 = dma.done [#allocation6], 256
    $region17: #{tpu_custom_call.1} parent=1 // pred_fallthru
      _
    %s51 = sadd.s32 0, 0
    %s52 = smul.u32 2, %s51
    %s53 = sadd.s32 0, 0
    %s54 = smul.u32 2, %s53
    %p55 = scmp.eq.s32.totalorder 0, 0
    // Predicated region
    $region18: #{tpu_custom_call.1} parent=1 // pred_check
      %p56 = pneg %p55
    $region19: #{tpu_custom_call.1} parent=1 // pred_check_branch
      %58 = sbr.rel (%p56) target = $region21
    $region20: #{tpu_custom_call.1} parent=1 // pred_region
      %59 = vst [vmem:[#allocation7] sm:$0xff] 0.0
      %60 = vst [vmem:[#allocation8] sm:$0xff] 0.0
    $region21: #{tpu_custom_call.1} parent=1 // pred_fallthru
      _
    %v61 = vld [vmem:[#allocation2] sm:$0xff]
    %v62 = vld [vmem:[#allocation2 + $0x8] sm:$0xff]
    %v63 = vld [vmem:[#allocation5] sm:$0xff]
    %v64 = vld [vmem:[#allocation5 + $0x8] sm:$0xff]
    %v65 = vsub.f32 %v61, %v63
    %v66 = vsub.f32 %v62, %v64
    %v67 = vmul.f32 %v65, %v65
    %v68 = vmul.f32 %v66, %v66
    %v69 = vadd.f32 %v67, %v68
    %v70 = vadd.f32 %v69, 0.0
    %v71 = vmul.f32 %v63, %v63
    %v72 = vmul.f32 %v64, %v64
    %v73 = vadd.f32 %v71, %v72
    %v74 = vadd.f32 %v73, 0.0
    %v75 = vld [vmem:[#allocation7] sm:$0xff]
    %v76 = vadd.f32 %v75, %v70
    %77 = vst [vmem:[#allocation7] sm:$0xff] %v76
    %v78 = vld [vmem:[#allocation8] sm:$0xff]
    %v79 = vadd.f32 %v78, %v74
    %80 = vst [vmem:[#allocation8] sm:$0xff] %v79
    // Predicated region
    $region22: #{tpu_custom_call.1} parent=1 // pred_check
      _
    $region23: #{tpu_custom_call.1} parent=1 // pred_check_branch
      %82 = sbr.rel (0) target = $region25
    $region24: #{tpu_custom_call.1} parent=1 // pred_region
      %s84 = ssub.s32 128, 128
      %85 = vsyncadd [#allocation4], %s84
      %s87 = sshll.u32 [#allocation7], 4
      %s88 = int_to_ptr.vmem [resolvable:$true] %s87
      %90 = dma.vmem_to_hbm [thread:$0]  %s88, 128, %s2, [#allocation4]
    $region25: #{tpu_custom_call.1} parent=1 // pred_fallthru
      _
    // Predicated region
    $region26: #{tpu_custom_call.1} parent=1 // pred_check
      _
    $region27: #{tpu_custom_call.1} parent=1 // pred_check_branch
      %92 = sbr.rel (0) target = $region29
    $region28: #{tpu_custom_call.1} parent=1 // pred_region
      %s94 = ssub.s32 128, 128
      %95 = vsyncadd [#allocation9], %s94
      %s97 = sshll.u32 [#allocation8], 4
      %s98 = int_to_ptr.vmem [resolvable:$true] %s97
      %100 = dma.vmem_to_hbm [thread:$0]  %s98, 128, %s3, [#allocation9]
    $region29: #{tpu_custom_call.1} parent=1 // pred_fallthru
      _
    // Predicated region
    $region30: #{tpu_custom_call.1} parent=1 // pred_check
      _
    $region31: #{tpu_custom_call.1} parent=1 // pred_check_branch
      %102 = sbr.rel (0) target = $region33
    $region32: #{tpu_custom_call.1} parent=1 // pred_region
      %103 = dma.done [#allocation4], 128
    $region33: #{tpu_custom_call.1} parent=1 // pred_fallthru
      _
    // Predicated region
    $region34: #{tpu_custom_call.1} parent=1 // pred_check
      _
    $region35: #{tpu_custom_call.1} parent=1 // pred_check_branch
      %105 = sbr.rel (0) target = $region37
    $region36: #{tpu_custom_call.1} parent=1 // pred_region
      %106 = dma.done [#allocation9], 128
    $region37: #{tpu_custom_call.1} parent=1 // pred_fallthru
      _
    %107 = vsyncpa [#allocation3], 1
    %108 = vsyncpa [#allocation6], 1
    %109 = vsyncpa [#allocation4], 1
    %110 = vsyncpa [#allocation9], 1

</llo_original>
